<compile_context>
chip_gen: v5e
topology: v5e:2x2
jax: 0.10.0
libtpu: 0.0.40
codegen_flags: <defaults>
</compile_context>

<pallas_src>
import math
from functools import partial

import jax
import jax.numpy as jnp
from jax.experimental import pallas as pl
from jax.experimental.pallas import tpu as pltpu


def _critic_kernel(x_ref, w1_ref, b1_ref, w2_ref, b2_ref, w3_ref, b3_ref, out_ref,
                   *, compute_dtype):
    # Layer 1: (TB, S) @ (S, H) on the MXU, f32 accumulation.
    x = x_ref[...].astype(compute_dtype)
    h1 = jnp.dot(x, w1_ref[...], preferred_element_type=jnp.float32)
    h1 = jnp.maximum(h1 + b1_ref[...], 0.0)

    # Layer 2: (TB, H) @ (H, H) on the MXU, f32 accumulation.
    h2 = jnp.dot(h1.astype(compute_dtype), w2_ref[...],
                 preferred_element_type=jnp.float32)
    h2 = jnp.maximum(h2 + b2_ref[...], 0.0)

    # Layer 3 (output dim 1): VPU multiply + lane (XLU) reduction instead of an
    # N=1 MXU matmul. b3 is a scalar fetched from SMEM.
    v = jnp.sum(h2 * w3_ref[...], axis=-1, keepdims=True) + b3_ref[0, 0]
    out_ref[...] = v.astype(out_ref.dtype)


def critic_forward(state, params, *, block_b=512, compute_dtype=jnp.bfloat16):
    """state: (B, state_dim) f32. params: dict of w1,b1,w2,b2,w3,b3 (f32)."""
    B, S = state.shape
    H = params["w1"].shape[1]

    # Batch tile: multiple of 8 sublanes, capped at block_b; pad batch to a multiple.
    tb = min(block_b, ((B + 7) // 8) * 8)
    num_tiles = pl.cdiv(B, tb)
    b_pad = num_tiles * tb
    if b_pad != B:
        state = jnp.pad(state, ((0, b_pad - B), (0, 0)))

    # bf16 operands for the MXU (tiny weight tensors; cast once in the wrapper).
    w1 = params["w1"].astype(compute_dtype)
    w2 = params["w2"].astype(compute_dtype)
    b1 = params["b1"].astype(jnp.float32)
    b2 = params["b2"].astype(jnp.float32)
    w3 = params["w3"].reshape(1, H).astype(jnp.float32)   # row vector for the VPU head
    b3 = params["b3"].reshape(1, 1).astype(jnp.float32)   # scalar -> SMEM

    # Constant index map => block never changes => stays VMEM-resident across tiles.
    resident = lambda shape: pl.BlockSpec(shape, lambda i: (0,) * len(shape))

    out = pl.pallas_call(
        partial(_critic_kernel, compute_dtype=compute_dtype),
        out_shape=jax.ShapeDtypeStruct((b_pad, 1), jnp.float32),
        grid=(num_tiles,),
        in_specs=[
            pl.BlockSpec((tb, S), lambda i: (i, 0)),            # state tile
            resident((S, H)),                                   # w1
            resident((1, H)),                                   # b1
            resident((H, H)),                                   # w2
            resident((1, H)),                                   # b2
            resident((1, H)),                                   # w3 (row)
            pl.BlockSpec(memory_space=pltpu.MemorySpace.SMEM),  # b3 scalar
        ],
        out_specs=pl.BlockSpec((tb, 1), lambda i: (i, 0)),
        compiler_params=pltpu.CompilerParams(
            dimension_semantics=("parallel",),
        ),
    )(state, w1, b1, w2, b2, w3, b3)

    return out[:B]


def init_critic_params(key, state_dim, hidden_dim):
    """Deterministic init mimicking PyTorch nn.Linear default (U[-1/sqrt(fan_in), 1/sqrt(fan_in)])."""
    ks = jax.random.split(key, 6)

    def linear(kw, kb, fan_in, fan_out):
        bound = 1.0 / math.sqrt(fan_in)
        w = jax.random.uniform(kw, (fan_in, fan_out), jnp.float32, -bound, bound)
        b = jax.random.uniform(kb, (1, fan_out), jnp.float32, -bound, bound)
        return w, b

    w1, b1 = linear(ks[0], ks[1], state_dim, hidden_dim)
    w2, b2 = linear(ks[2], ks[3], hidden_dim, hidden_dim)
    w3, b3 = linear(ks[4], ks[5], hidden_dim, 1)
    return {"w1": w1, "b1": b1, "w2": w2, "b2": b2, "w3": w3, "b3": b3}


def critic_reference(state, params, compute_dtype=jnp.float32):
    """Pure-JAX reference; compute_dtype lets us mirror the kernel's bf16 matmuls."""
    w1 = params["w1"].astype(compute_dtype)
    w2 = params["w2"].astype(compute_dtype)
    h1 = jnp.maximum(
        jnp.dot(state.astype(compute_dtype), w1, preferred_element_type=jnp.float32)
        + params["b1"], 0.0)
    h2 = jnp.maximum(
        jnp.dot(h1.astype(compute_dtype), w2, preferred_element_type=jnp.float32)
        + params["b2"], 0.0)
    v = jnp.sum(h2 * params["w3"].reshape(1, -1), axis=-1, keepdims=True) + params["b3"]
    return v


if __name__ == "__main__":
    B, STATE_DIM, HIDDEN_DIM = 8, 16, 32

    key = jax.random.PRNGKey(0)
    k_state, k_params, k_big = jax.random.split(key, 3)

    state = jax.random.normal(k_state, (B, STATE_DIM), dtype=jnp.float32)
    params = init_critic_params(k_params, STATE_DIM, HIDDEN_DIM)

    out = jax.block_until_ready(critic_forward(state, params))
    assert out.shape == (B, 1), out.shape

    ref_bf16 = critic_reference(state, params, compute_dtype=jnp.bfloat16)
    ref_f32 = critic_reference(state, params, compute_dtype=jnp.float32)
    assert jnp.allclose(out, ref_bf16, atol=1e-3, rtol=1e-3), (out, ref_bf16)
    assert jnp.allclose(out, ref_f32, atol=5e-2, rtol=5e-2), (out, ref_f32)

    # Larger, non-multiple-of-tile batch: exercises the padded, multi-tile grid path.
    B2 = 1000
    state2 = jax.random.normal(k_big, (B2, STATE_DIM), dtype=jnp.float32)
    out2 = jax.block_until_ready(critic_forward(state2, params))
    ref2 = critic_reference(state2, params, compute_dtype=jnp.bfloat16)
    assert out2.shape == (B2, 1), out2.shape
    assert jnp.allclose(out2, ref2, atol=1e-3, rtol=1e-3), float(
        jnp.max(jnp.abs(out2 - ref2)))

    print("KERNEL_OK")
</pallas_src>

<mosaic_0001>
module attributes {stable_mosaic.version = 11 : i64} {
  func.func @_critic_kernel(%arg0: i32, %arg1: memref<8x16xf32, #tpu.memory_space<vmem>>, %arg2: memref<16x32xbf16, #tpu.memory_space<vmem>>, %arg3: memref<1x32xf32, #tpu.memory_space<vmem>>, %arg4: memref<32x32xbf16, #tpu.memory_space<vmem>>, %arg5: memref<1x32xf32, #tpu.memory_space<vmem>>, %arg6: memref<1x32xf32, #tpu.memory_space<vmem>>, %arg7: memref<1x1xf32, #tpu.memory_space<smem>>, %arg8: memref<8x1xf32, #tpu.memory_space<vmem>>) attributes {dimension_semantics = [#tpu.dimension_semantics<parallel>], iteration_bounds = array<i64: 1>, scalar_prefetch = 0 : i64, scratch_operands = 0 : i64, tpu.core_type = #tpu.core_type<tc>, window_params = [{transform_indices = @transform_0, window_bounds = array<i64: 8, 16>}, {pipeline_mode = #tpu.pipeline_mode<synchronous>, transform_indices = @transform_1, window_bounds = array<i64: 16, 32>}, {pipeline_mode = #tpu.pipeline_mode<synchronous>, transform_indices = @transform_2, window_bounds = array<i64: 1, 32>}, {pipeline_mode = #tpu.pipeline_mode<synchronous>, transform_indices = @transform_3, window_bounds = array<i64: 32, 32>}, {pipeline_mode = #tpu.pipeline_mode<synchronous>, transform_indices = @transform_4, window_bounds = array<i64: 1, 32>}, {pipeline_mode = #tpu.pipeline_mode<synchronous>, transform_indices = @transform_5, window_bounds = array<i64: 1, 32>}, {transform_indices = @transform_6, window_bounds = array<i64: 1, 1>}, {transform_indices = @transform_7, window_bounds = array<i64: 8, 1>}]} {
    %c0 = arith.constant 0 : index
    %c0_0 = arith.constant 0 : index
    %0 = vector.load %arg1[%c0, %c0_0] : memref<8x16xf32, #tpu.memory_space<vmem>>, vector<8x16xf32>
    %1 = arith.truncf %0 : vector<8x16xf32> to vector<8x16xbf16>
    %c0_1 = arith.constant 0 : index
    %c0_2 = arith.constant 0 : index
    %2 = vector.load %arg2[%c0_1, %c0_2] : memref<16x32xbf16, #tpu.memory_space<vmem>>, vector<16x32xbf16>
    %cst = arith.constant dense<0.000000e+00> : vector<8x32xf32>
    %3 = tpu.matmul %1, %2, %cst {dimension_numbers = #tpu.dot_dimension_numbers<[1], [0], [0], [1], [0, 0, 1, 1], [], []>} : vector<8x16xbf16>, vector<16x32xbf16>, vector<8x32xf32> -> vector<8x32xf32>
    %c0_3 = arith.constant 0 : index
    %c0_4 = arith.constant 0 : index
    %4 = vector.load %arg3[%c0_3, %c0_4] : memref<1x32xf32, #tpu.memory_space<vmem>>, vector<1x32xf32>
    %5 = vector.broadcast %4 : vector<1x32xf32> to vector<8x32xf32>
    %6 = arith.addf %3, %5 : vector<8x32xf32>
    %cst_5 = arith.constant 0.000000e+00 : f32
    %7 = vector.broadcast %cst_5 : f32 to vector<8x32xf32>
    %8 = arith.maximumf %6, %7 : vector<8x32xf32>
    %9 = arith.truncf %8 : vector<8x32xf32> to vector<8x32xbf16>
    %c0_6 = arith.constant 0 : index
    %c0_7 = arith.constant 0 : index
    %10 = vector.load %arg4[%c0_6, %c0_7] : memref<32x32xbf16, #tpu.memory_space<vmem>>, vector<32x32xbf16>
    %cst_8 = arith.constant dense<0.000000e+00> : vector<8x32xf32>
    %11 = tpu.matmul %9, %10, %cst_8 {dimension_numbers = #tpu.dot_dimension_numbers<[1], [0], [0], [1], [0, 0, 1, 1], [], []>} : vector<8x32xbf16>, vector<32x32xbf16>, vector<8x32xf32> -> vector<8x32xf32>
    %c0_9 = arith.constant 0 : index
    %c0_10 = arith.constant 0 : index
    %12 = vector.load %arg5[%c0_9, %c0_10] : memref<1x32xf32, #tpu.memory_space<vmem>>, vector<1x32xf32>
    %13 = vector.broadcast %12 : vector<1x32xf32> to vector<8x32xf32>
    %14 = arith.addf %11, %13 : vector<8x32xf32>
    %cst_11 = arith.constant 0.000000e+00 : f32
    %15 = vector.broadcast %cst_11 : f32 to vector<8x32xf32>
    %16 = arith.maximumf %14, %15 : vector<8x32xf32>
    %c0_12 = arith.constant 0 : index
    %c0_13 = arith.constant 0 : index
    %17 = vector.load %arg6[%c0_12, %c0_13] : memref<1x32xf32, #tpu.memory_space<vmem>>, vector<1x32xf32>
    %18 = vector.broadcast %17 : vector<1x32xf32> to vector<8x32xf32>
    %19 = arith.mulf %16, %18 : vector<8x32xf32>
    %cst_14 = arith.constant dense<0.000000e+00> : vector<8xf32>
    %20 = vector.multi_reduction <add>, %19, %cst_14 [1] : vector<8x32xf32> to vector<8xf32>
    %21 = vector.shape_cast %20 : vector<8xf32> to vector<8x1xf32>
    %c0_15 = arith.constant 0 : index
    %c0_16 = arith.constant 0 : index
    %22 = memref.load %arg7[%c0_15, %c0_16] : memref<1x1xf32, #tpu.memory_space<smem>>
    %23 = vector.broadcast %22 : f32 to vector<8x1xf32>
    %24 = arith.addf %21, %23 : vector<8x1xf32>
    %c0_17 = arith.constant 0 : index
    %c0_18 = arith.constant 0 : index
    %25 = vector.load %arg8[%c0_17, %c0_18] : memref<8x1xf32, #tpu.memory_space<vmem>>, vector<8x1xf32>
    tpu.vector_store %arg8[%c0_17, %c0_18], %24 {strides = array<i32>} : memref<8x1xf32, #tpu.memory_space<vmem>>, vector<8x1xf32>,
    return
  }
  func.func @transform_0(%arg0: i32) -> (i32, i32) {
    %c0_i32 = arith.constant 0 : i32
    %c0_i32_0 = arith.constant 0 : i32
    return %arg0, %c0_i32 : i32, i32
  }
  func.func @transform_1(%arg0: i32) -> (i32, i32) {
    %c0_i32 = arith.constant 0 : i32
    %c0_i32_0 = arith.constant 0 : i32
    %c0_i32_1 = arith.constant 0 : i32
    return %c0_i32, %c0_i32_0 : i32, i32
  }
  func.func @transform_2(%arg0: i32) -> (i32, i32) {
    %c0_i32 = arith.constant 0 : i32
    %c0_i32_0 = arith.constant 0 : i32
    %c0_i32_1 = arith.constant 0 : i32
    return %c0_i32, %c0_i32_0 : i32, i32
  }
  func.func @transform_3(%arg0: i32) -> (i32, i32) {
    %c0_i32 = arith.constant 0 : i32
    %c0_i32_0 = arith.constant 0 : i32
    %c0_i32_1 = arith.constant 0 : i32
    return %c0_i32, %c0_i32_0 : i32, i32
  }
  func.func @transform_4(%arg0: i32) -> (i32, i32) {
    %c0_i32 = arith.constant 0 : i32
    %c0_i32_0 = arith.constant 0 : i32
    %c0_i32_1 = arith.constant 0 : i32
    return %c0_i32, %c0_i32_0 : i32, i32
  }
  func.func @transform_5(%arg0: i32) -> (i32, i32) {
    %c0_i32 = arith.constant 0 : i32
    %c0_i32_0 = arith.constant 0 : i32
    %c0_i32_1 = arith.constant 0 : i32
    return %c0_i32, %c0_i32_0 : i32, i32
  }
  func.func @transform_6(%arg0: i32) -> (i32, i32) {
    %c0_i32 = arith.constant 0 : i32
    %c0_i32_0 = arith.constant 0 : i32
    %c0_i32_1 = arith.constant 0 : i32
    return %c0_i32, %c0_i32_0 : i32, i32
  }
  func.func @transform_7(%arg0: i32) -> (i32, i32) {
    %c0_i32 = arith.constant 0 : i32
    %c0_i32_0 = arith.constant 0 : i32
    return %arg0, %c0_i32 : i32, i32
  }
}

</mosaic_0001>

<llo_original>
// kernel: tpu_custom_call.1
$region0: #{tpu_custom_call.1}
  #allocation0 [shape = 'u32[]', space=smem, size = 0x4, offset = 0x4, fixed_abs, tag = 'smem constant byte address 0x4 - core index']
  #allocation1 [shape = 'u32[72,128]{1,0:T(1,128)}', space=vmem, size = 0x9000, scoped, tag = 'internal scratch']
  #allocation2 [shape = 'f32[1,1]{1,0:T(1,128)S(6)}', space=smem, size = 0x200, scoped, tag = 'scoped memory for tpu_custom_call.1']
  %s0 = inlined_call_operand.hbm [shape: f32[8,16], index: 0, kind: input, shape index: {}]
  %s1 = inlined_call_operand.hbm [shape: bf16[16,32], index: 1, kind: input, shape index: {}]
  %s2 = inlined_call_operand.vmem [shape: f32[1,32], index: 2, kind: input, shape index: {}]
  %s3 = inlined_call_operand.hbm [shape: bf16[32,32], index: 3, kind: input, shape index: {}]
  %s4 = inlined_call_operand.vmem [shape: f32[1,32], index: 4, kind: input, shape index: {}]
  %s5 = inlined_call_operand.vmem [shape: f32[1,32], index: 5, kind: input, shape index: {}]
  %s6 = inlined_call_operand.<no memory space> [shape: f32[1,1], index: 6, kind: input, shape index: {}]
  %s7 = inlined_call_operand.vmem [shape: f32[8,1], index: 7, kind: output, shape index: {}]
  %s8 = sld [smem:[#allocation0]]
  $region50: #{tpu_custom_call.1} parent=0
    _
  %s10 = ssub.s32 1, %s8
  %s11 = scalar_select 0, %s10, %s8
  %12 = sst [smem:[#allocation2]] %s6
  $region1: #{tpu_custom_call.1} parent=0
    #allocation3 [shape = 'u8[4096]{0}', space=vmem, size = 0x1000, scoped, tag = 'input window, operand 0, single buffered']
    #allocation4 [shape = 's32[1]{0}', space=sflag, size = 0x4, scoped, tag = 'scoped memory for tpu_custom_call.1']
    #allocation5 [shape = 'u8[4096]{0}', space=vmem, size = 0x1000, scoped, tag = 'input window, operand 1, single buffered']
    #allocation6 [shape = 's32[1]{0}', space=sflag, size = 0x4, scoped, tag = 'scoped memory for tpu_custom_call.1']
    #allocation7 [shape = 'u8[8192]{0}', space=vmem, size = 0x2000, scoped, tag = 'input window, operand 3, single buffered']
    %13 = vsyncpa [#allocation4], 0
    %14 = vsyncpa [#allocation6], 0
    // Predicated region
    $region2: #{tpu_custom_call.1} parent=1 // pred_check
      _
    $region3: #{tpu_custom_call.1} parent=1 // pred_check_branch
      %16 = sbr.rel (0) target = $region5
    $region4: #{tpu_custom_call.1} parent=1 // pred_region
      %18 = vsyncadd [#allocation4], 0
      %s20 = sshll.u32 %s0, 4
      %s21 = int_to_ptr.hbm [resolvable:$true] %s20
      %s22 = sshll.u32 [#allocation3], 4
      %s23 = int_to_ptr.vmem [resolvable:$true] %s22
      %25 = dma.hbm_to_vmem [thread:$0]  %s21, 128, %s23, [#allocation4]
    $region5: #{tpu_custom_call.1} parent=1 // pred_fallthru
      _
    // Predicated region
    $region6: #{tpu_custom_call.1} parent=1 // pred_check
      _
    $region7: #{tpu_custom_call.1} parent=1 // pred_check_branch
      %27 = sbr.rel (0) target = $region9
    $region8: #{tpu_custom_call.1} parent=1 // pred_region
      %29 = vsyncadd [#allocation6], 0
      %s30 = sshll.u32 %s1, 4
      %s31 = int_to_ptr.hbm [resolvable:$true] %s30
      %s32 = sshll.u32 [#allocation5], 4
      %s33 = int_to_ptr.vmem [resolvable:$true] %s32
      %38 = dma.hbm_to_vmem [thread:$0]  %s31, 128, %s33, [#allocation6], 64, 64, 4
    $region9: #{tpu_custom_call.1} parent=1 // pred_fallthru
      _
    // Predicated region
    $region10: #{tpu_custom_call.1} parent=1 // pred_check
      _
    $region11: #{tpu_custom_call.1} parent=1 // pred_check_branch
      %40 = sbr.rel (0) target = $region13
    $region12: #{tpu_custom_call.1} parent=1 // pred_region
      _
    $region13: #{tpu_custom_call.1} parent=1 // pred_fallthru
      _
    // Predicated region
    $region14: #{tpu_custom_call.1} parent=1 // pred_check
      _
    $region15: #{tpu_custom_call.1} parent=1 // pred_check_branch
      %42 = sbr.rel (0) target = $region17
    $region16: #{tpu_custom_call.1} parent=1 // pred_region
      %44 = vsyncadd [#allocation6], 0
      %s45 = sshll.u32 %s3, 4
      %s46 = int_to_ptr.hbm [resolvable:$true] %s45
      %s47 = sshll.u32 [#allocation7], 4
      %s48 = int_to_ptr.vmem [resolvable:$true] %s47
      %53 = dma.hbm_to_vmem [thread:$0]  %s46, 256, %s48, [#allocation6], 64, 64, 4
    $region17: #{tpu_custom_call.1} parent=1 // pred_fallthru
      _
    // Predicated region
    $region18: #{tpu_custom_call.1} parent=1 // pred_check
      _
    $region19: #{tpu_custom_call.1} parent=1 // pred_check_branch
      %55 = sbr.rel (0) target = $region21
    $region20: #{tpu_custom_call.1} parent=1 // pred_region
      _
    $region21: #{tpu_custom_call.1} parent=1 // pred_fallthru
      _
    // Predicated region
    $region22: #{tpu_custom_call.1} parent=1 // pred_check
      _
    $region23: #{tpu_custom_call.1} parent=1 // pred_check_branch
      %57 = sbr.rel (0) target = $region25
    $region24: #{tpu_custom_call.1} parent=1 // pred_region
      _
    $region25: #{tpu_custom_call.1} parent=1 // pred_fallthru
      _
    // Predicated region
    $region26: #{tpu_custom_call.1} parent=1 // pred_check
      _
    $region27: #{tpu_custom_call.1} parent=1 // pred_check_branch
      %59 = sbr.rel (0) target = $region29
    $region28: #{tpu_custom_call.1} parent=1 // pred_region
      _
    $region29: #{tpu_custom_call.1} parent=1 // pred_fallthru
      _
    // Predicated region
    $region30: #{tpu_custom_call.1} parent=1 // pred_check
      _
    $region31: #{tpu_custom_call.1} parent=1 // pred_check_branch
      %61 = sbr.rel (0) target = $region33
    $region32: #{tpu_custom_call.1} parent=1 // pred_region
      %63 = dma.done [#allocation4], 128
    $region33: #{tpu_custom_call.1} parent=1 // pred_fallthru
      _
    // Predicated region
    $region34: #{tpu_custom_call.1} parent=1 // pred_check
      _
    $region35: #{tpu_custom_call.1} parent=1 // pred_check_branch
      %65 = sbr.rel (0) target = $region37
    $region36: #{tpu_custom_call.1} parent=1 // pred_region
      %67 = dma.done [#allocation6], 128
    $region37: #{tpu_custom_call.1} parent=1 // pred_fallthru
      _
    // Predicated region
    $region38: #{tpu_custom_call.1} parent=1 // pred_check
      _
    $region39: #{tpu_custom_call.1} parent=1 // pred_check_branch
      %69 = sbr.rel (0) target = $region41
    $region40: #{tpu_custom_call.1} parent=1 // pred_region
      %71 = dma.done [#allocation6], 256
    $region41: #{tpu_custom_call.1} parent=1 // pred_fallthru
      _
    %v73 = vld [vmem:[#allocation3] sm:$0xff]
    %v74 = vpack.c.bf16 %v73, %v73
    %v75 = vld [vmem:[#allocation5] sm:$0xf]
    %v76 = vld [vmem:[#allocation5 + $0x4] sm:$0xf]
    %v77 = vld [vmem:[%s2] sm:$0x1]
    %v79 = vperm.slane %v77, 0
    %v83 = vunpack.c.l.b16 %v75
    %v84 = vunpack.c.l.b16 %v76
    %v85 = vpack.c.b16 %v84, %v83
    %vm87 = vcmask 130048
    %v89 = vsel %vm87, %v74, 0
    %91 = vmatpush.bf16.msra.mxu0 0
    %92 = vmatpush.bf16.msra.mxu0 0
    %93 = vmatpush.bf16.msra.mxu0 0
    %94 = vmatpush.bf16.msra.mxu0 0
    %95 = vmatpush.bf16.msra.mxu0 0
    %96 = vmatpush.bf16.msra.mxu0 0
    %97 = vmatpush.bf16.msra.mxu0 0
    %98 = vmatpush.bf16.msra.mxu0 %v85
    %99 = vmatmul.bf16.gmra.mxu0 %v89
    %v100 = vpop.f32.mrf.mxu0
    %v101 = vadd.f32 %v79, %v100
    %v102 = vpop.f32.mrf.mxu0
    %103 = vdwg.mxu0
    %v104 = vmax.f32 %v101, 0.0
    %v105 = vpack.c.bf16 %v104, %v104
    %v106 = vld [vmem:[#allocation7] sm:$0xf]
    %v107 = vld [vmem:[#allocation7 + $0x4] sm:$0xf]
    %v108 = vld [vmem:[#allocation7 + $0x8] sm:$0xf]
    %v109 = vld [vmem:[#allocation7 + $0xc] sm:$0xf]
    %v110 = vld [vmem:[%s4] sm:$0x1]
    %v112 = vperm.slane %v110, 0
    %v118 = vunpack.c.l.b16 %v106
    %v119 = vunpack.c.l.b16 %v107
    %v120 = vunpack.c.l.b16 %v108
    %v121 = vunpack.c.l.b16 %v109
    %v122 = vpack.c.b16 %v119, %v118
    %v123 = vpack.c.b16 %v121, %v120
    %vm126 = vcmask 261120
    %v128 = vsel %vm126, %v105, 0
    %130 = vmatpush.bf16.msra.mxu0 0
    %131 = vmatpush.bf16.msra.mxu0 0
    %132 = vmatpush.bf16.msra.mxu0 0
    %133 = vmatpush.bf16.msra.mxu0 0
    %134 = vmatpush.bf16.msra.mxu0 0
    %135 = vmatpush.bf16.msra.mxu0 0
    %136 = vmatpush.bf16.msra.mxu0 %v123
    %137 = vmatpush.bf16.msra.mxu0 %v122
    %138 = vmatmul.bf16.gmra.mxu0 %v128
    %v139 = vpop.f32.mrf.mxu0
    %v140 = vadd.f32 %v112, %v139
    %v141 = vpop.f32.mrf.mxu0
    %142 = vdwg.mxu0
    %v143 = vmax.f32 %v140, 0.0
    %v144 = vld [vmem:[%s5] sm:$0x1]
    %v146 = vperm.slane %v144, 0
    %v148 = vmul.f32 %v143, %v146
    %v149 = vsel %vm126, %v148, 0.0
    %150 = vadd.xlane.f32.xlu0 %v149
    %v151 = vpop.xlane.xlu0 %150
    %s152 = sld [smem:[#allocation2]]
    %v153 = vstv %s152
    %v154 = vadd.f32 %v151, %v153
    %vm155 = vcmask 7168
    %156 = vst.msk [vmem:[%s7] sm:$0xff] %vm155, %v154
    // Predicated region
    $region42: #{tpu_custom_call.1} parent=1 // pred_check
      _
    $region43: #{tpu_custom_call.1} parent=1 // pred_check_branch
      %158 = sbr.rel (0) target = $region45
    $region44: #{tpu_custom_call.1} parent=1 // pred_region
      _
    $region45: #{tpu_custom_call.1} parent=1 // pred_fallthru
      _
    // Predicated region
    $region46: #{tpu_custom_call.1} parent=1 // pred_check
      _
    $region47: #{tpu_custom_call.1} parent=1 // pred_check_branch
      %160 = sbr.rel (0) target = $region49
    $region48: #{tpu_custom_call.1} parent=1 // pred_region
      _
    $region49: #{tpu_custom_call.1} parent=1 // pred_fallthru
      _
    %161 = vsyncpa [#allocation4], 1
    %162 = vsyncpa [#allocation6], 1

</llo_original>
